<compile_context>
chip_gen: v5e
topology: v5e:2x2
jax: 0.10.0
libtpu: 0.0.40
codegen_flags: <defaults>
</compile_context>

<pallas_src>
import math

import jax
import jax.numpy as jnp
from jax.experimental import pallas as pl
from jax.experimental.pallas import tpu as pltpu


def _round_up(x, m):
    return (x + m - 1) // m * m


def _tpu_vmem_and_tm_target():
    """Physical per-core VMEM and a ridge-derived default token-tile size."""
    vmem = 64 << 20                      # conservative default (v7x per-TC VMEM)
    try:
        vmem = int(pltpu.get_tpu_info().vmem_capacity_bytes)
    except Exception:                    # interpret mode / query unavailable
        pass
    # Streamed-weight arithmetic intensity ~ tm flops per weight byte (bf16):
    #   v5e ridge ~240 flops/B, v6e ~650 flops/B (128 MiB VMEM) -> tm ~1024
    #   v7x ridge ~310 flops/B (64 MiB VMEM)                    -> tm ~512
    tm_target = 1024 if vmem >= (96 << 20) else 512
    return vmem, tm_target


# ---------------------------------------------------------------------------
# Kernels
# ---------------------------------------------------------------------------

def _ffn_kernel_resident(x_ref, w1_ref, b1_ref, w2_ref, b2_ref, o_ref):
    """Whole-d_ff variant: weights VMEM-resident, single (token) grid axis."""
    h = jnp.dot(x_ref[...], w1_ref[...], preferred_element_type=jnp.float32)
    h = jnp.maximum(h + b1_ref[...], 0.0)
    # TODO(synk): training-mode dropout (pltpu.prng_seed + prng_random_bits
    # mask scaled by 1/(1-p)) would go here; eval mode => identity.
    y = jnp.dot(h.astype(w2_ref.dtype), w2_ref[...],
                preferred_element_type=jnp.float32)
    o_ref[...] = (y + b2_ref[...]).astype(o_ref.dtype)


def _ffn_kernel_stream(x_ref, w1_ref, b1_ref, w2_ref, b2_ref, o_ref, acc_ref):
    """d_ff-tiled variant: accumulate linear2 partials in an f32 VMEM scratch.

    Requires num_programs(1) >= 2 (the wrapper routes single-slab cases to the
    resident kernel).
    """
    k = pl.program_id(1)
    nk = pl.num_programs(1)

    # linear1 (this d_ff slab) on the MXU; bias-add + ReLU in f32 on the VPU.
    h = jnp.dot(x_ref[...], w1_ref[...], preferred_element_type=jnp.float32)
    h = jnp.maximum(h + b1_ref[...], 0.0)
    # TODO(synk): training-mode dropout would go here; eval mode => identity.
    partial = jnp.dot(h.astype(w2_ref.dtype), w2_ref[...],
                      preferred_element_type=jnp.float32)

    @pl.when(k == 0)
    def _first():                     # first slab overwrites (no zero-init pass)
        acc_ref[...] = partial

    @pl.when(jnp.logical_and(k > 0, k < nk - 1))
    def _middle():
        acc_ref[...] += partial

    @pl.when(k == nk - 1)
    def _last():                      # fuse the last partial into the output write
        o_ref[...] = (acc_ref[...] + partial + b2_ref[...]).astype(o_ref.dtype)


# ---------------------------------------------------------------------------
# Host-side wrappers
# ---------------------------------------------------------------------------

def prepare_ffn_params(w1, b1, w2, b2, *, compute_dtype=jnp.bfloat16):
    """One-time weight prep (do this at init, NOT per call).

    Casts matmul operands to compute_dtype and pads d_ff up to a multiple of
    128 (lane width).  The f32->bf16 cast + pad reads/writes the full weights
    in HBM, so doing it per call would rival the kernel's own weight traffic.

    Weights are [in, out] (transposed vs. PyTorch nn.Linear's [out, in]).
    """
    d_model, d_ff = w1.shape
    assert w2.shape == (d_ff, d_model)
    d_ff_pad = _round_up(d_ff, 128)
    pad = d_ff_pad - d_ff
    w1c = w1.astype(compute_dtype)
    w2c = w2.astype(compute_dtype)
    b1f = b1.astype(jnp.float32).reshape(1, d_ff)
    b2f = b2.astype(jnp.float32).reshape(1, d_model)
    if pad:
        # relu(x @ 0 + 0) = 0 and the matching W2 rows are also 0, so the
        # padding contributes exactly nothing to the output.
        w1c = jnp.pad(w1c, ((0, 0), (0, pad)))
        b1f = jnp.pad(b1f, ((0, 0), (0, pad)))
        w2c = jnp.pad(w2c, ((0, pad), (0, 0)))
    return w1c, b1f, w2c, b2f


def ffn_apply(x, prepared_params, *, tm=None, tff=None):
    """y = linear2(relu(linear1(x))), eval-mode dropout (identity).

    `prepared_params` must come from prepare_ffn_params (weights already in
    compute dtype, d_ff padded to a multiple of 128).
    tm  : token-row tile (None => per-generation default).
    tff : d_ff slab size (None => weights VMEM-resident if they fit, else the
          largest multiple-of-128 divisor of d_ff that fits the VMEM budget).
    """
    w1c, b1f, w2c, b2f = prepared_params
    orig_dtype = x.dtype
    *lead, d_model = x.shape
    d_ff_pad = w1c.shape[1]
    assert w1c.shape[0] == d_model and w2c.shape == (d_ff_pad, d_model)

    compute_dtype = w1c.dtype
    cb = jnp.dtype(compute_dtype).itemsize
    ob = jnp.dtype(orig_dtype).itemsize

    n_tok = 1
    for s in lead:
        n_tok *= s

    vmem_cap, tm_target = _tpu_vmem_and_tm_target()
    vmem_budget = int(vmem_cap * 0.75)       # headroom for internal scratch

    # ---- token-tile (M) selection ------------------------------------------
    if tm is None:
        tm = tm_target
    # Keep >= 2 token tiles when tokens are plentiful so the "parallel" axis
    # can shard across both v7x TensorCores (and megacore on v5e/v6e).
    if n_tok >= 512:
        tm = min(tm, _round_up(-(-n_tok // 2), 256))
    if n_tok <= tm:
        tm = _round_up(max(n_tok, 8), 8)      # single tile covers everything
    elif tm >= 256:
        tm = _round_up(tm, 256)               # MXU-native M granularity
    else:
        tm = _round_up(max(tm, 8), 8)
    n_tok_pad = _round_up(n_tok, tm)

    # ---- VMEM cost model (includes the (tm, tff) intermediate h) ------------
    def vmem_estimate(tff_, resident):
        wb = 1 if resident else 2             # Buffered(1) vs double-buffered slabs
        est = 2 * tm * d_model * cb           # x tiles (double-buffered)
        est += 2 * tm * d_model * ob          # out tiles
        est += wb * (d_model * tff_ * cb + tff_ * 4 + tff_ * d_model * cb)
        est += 2 * d_model * 4                # b2
        est += tm * tff_ * 4 + tm * tff_ * cb  # h in f32 + compute-dtype cast copy
        if not resident:
            est += tm * d_model * 4           # f32 accumulator scratch
        return est

    # ---- d_ff tiling: make weights VMEM-resident when they fit --------------
    def snap_to_divisor(t):
        # largest multiple-of-128 divisor of d_ff_pad that is <= t
        m = d_ff_pad // 128
        best = 128
        for kk in range(1, m + 1):
            if m % kk == 0 and 128 * kk <= t:
                best = 128 * kk
        return best

    if tff is None:
        if vmem_estimate(d_ff_pad, resident=True) <= vmem_budget:
            tff = d_ff_pad                    # weights resident, streamed once
        else:
            cap = 2048 if vmem_cap >= (96 << 20) else 1024
            m = d_ff_pad // 128
            tff = 128
            for kk in range(1, m + 1):
                cand = 128 * kk
                if (m % kk == 0 and cand <= cap
                        and vmem_estimate(cand, resident=False) <= vmem_budget):
                    tff = cand
    else:
        tff = d_ff_pad if tff >= d_ff_pad else snap_to_divisor(tff)

    resident = (tff == d_ff_pad)

    # ---- activations: flatten tokens, cast, zero-pad the token axis ---------
    x2d = x.reshape(n_tok, d_model).astype(compute_dtype)
    if n_tok_pad != n_tok:
        x2d = jnp.pad(x2d, ((0, n_tok_pad - n_tok), (0, 0)))

    # ---- explicit VMEM limit, clamped to physical VMEM ----------------------
    vmem_est = vmem_estimate(tff, resident)
    vmem_limit = int(max(16 << 20,
                         min(int(vmem_est * 1.25) + (2 << 20),
                             vmem_cap - (8 << 20))))

    n_i = n_tok_pad // tm
    n_k = d_ff_pad // tff
    weight_bytes = 2 * d_model * d_ff_pad * cb
    cost = pl.CostEstimate(
        flops=4 * n_tok_pad * d_model * d_ff_pad,          # two matmuls
        transcendentals=0,
        bytes_accessed=(n_tok_pad * d_model * (cb + ob)
                        + (1 if resident else n_i) * weight_bytes),
    )

    if resident:
        once = pl.Buffered(1)          # grid-invariant: DMA'd exactly once
        grid_spec = pltpu.PrefetchScalarGridSpec(
            num_scalar_prefetch=0,
            grid=(n_i,),
            in_specs=[
                # x tile: varies with the token grid axis (double-buffered).
                pl.BlockSpec((tm, d_model), lambda i: (i, 0)),
                # Full W1 / b1 / W2 / b2: grid-invariant, single buffer.
                pl.BlockSpec((d_model, d_ff_pad), lambda i: (0, 0),
                             pipeline_mode=once),
                pl.BlockSpec((1, d_ff_pad), lambda i: (0, 0),
                             pipeline_mode=once),
                pl.BlockSpec((d_ff_pad, d_model), lambda i: (0, 0),
                             pipeline_mode=once),
                pl.BlockSpec((1, d_model), lambda i: (0, 0),
                             pipeline_mode=once),
            ],
            out_specs=pl.BlockSpec((tm, d_model), lambda i: (i, 0)),
            scratch_shapes=[],
        )
        kernel = _ffn_kernel_resident
        dim_sem = ("parallel",)
    else:
        assert n_k >= 2                # single-slab cases routed to resident
        grid_spec = pltpu.PrefetchScalarGridSpec(
            num_scalar_prefetch=0,
            grid=(n_i, n_k),
            in_specs=[
                # x tile: varies with i only (resident across the k loop).
                pl.BlockSpec((tm, d_model), lambda i, k: (i, 0)),
                # W1 column slab / b1 slab: vary with k (double-buffered DMA
                # overlaps with compute).
                pl.BlockSpec((d_model, tff), lambda i, k: (0, k)),
                pl.BlockSpec((1, tff), lambda i, k: (0, k)),
                # W2 row slab.
                pl.BlockSpec((tff, d_model), lambda i, k: (k, 0)),
                # b2: tiny, grid-invariant.
                pl.BlockSpec((1, d_model), lambda i, k: (0, 0)),
            ],
            # Lane-dense (tm, d_model) output tile, written once per i.
            out_specs=pl.BlockSpec((tm, d_model), lambda i, k: (i, 0)),
            scratch_shapes=[pltpu.VMEM((tm, d_model), jnp.float32)],
        )
        kernel = _ffn_kernel_stream
        dim_sem = ("parallel", "arbitrary")

    out2d = pl.pallas_call(
        kernel,
        out_shape=jax.ShapeDtypeStruct((n_tok_pad, d_model), orig_dtype),
        grid_spec=grid_spec,
        compiler_params=pltpu.CompilerParams(
            # Token axis shards across TensorCores; the d_ff reduction axis
            # (streaming path only) is "arbitrary" and kept last.
            dimension_semantics=dim_sem,
            vmem_limit_bytes=vmem_limit,
        ),
        cost_estimate=cost,
    )(x2d, w1c, b1f, w2c, b2f)

    return out2d[:n_tok].reshape(*lead, d_model)


def position_wise_feed_forward(x, w1, b1, w2, b2, *, tm=None, tff=None,
                               compute_dtype=jnp.bfloat16):
    """Drop-in convenience wrapper (prep + apply).

    Production code should call prepare_ffn_params ONCE at init and then
    ffn_apply per step, so the weight cast/pad is not re-emitted per call.
    """
    prepared = prepare_ffn_params(w1, b1, w2, b2, compute_dtype=compute_dtype)
    return ffn_apply(x, prepared, tm=tm, tff=tff)


def init_params(key, d_model, d_ff, dtype=jnp.float32):
    """Deterministic init matching nn.Linear's U(-1/sqrt(fan_in), 1/sqrt(fan_in))."""
    k1, k2, k3, k4 = jax.random.split(key, 4)
    bound1 = 1.0 / math.sqrt(d_model)
    bound2 = 1.0 / math.sqrt(d_ff)
    # stored as [in, out] (transposed vs. PyTorch's [out, in])
    w1 = jax.random.uniform(k1, (d_model, d_ff), dtype, -bound1, bound1)
    b1 = jax.random.uniform(k2, (d_ff,), dtype, -bound1, bound1)
    w2 = jax.random.uniform(k3, (d_ff, d_model), dtype, -bound2, bound2)
    b2 = jax.random.uniform(k4, (d_model,), dtype, -bound2, bound2)
    return w1, b1, w2, b2


def _reference(x, w1, b1, w2, b2):
    return jnp.maximum(x @ w1 + b1, 0.0) @ w2 + b2


if __name__ == "__main__":
    key = jax.random.PRNGKey(0)
    k1, k2, k3 = jax.random.split(key, 3)

    # --- test 1: small demo shapes (weights VMEM-resident, single grid axis) -
    batch, seq, d_model, d_ff = 2, 8, 32, 64
    x = jax.random.normal(k1, (batch, seq, d_model), jnp.float32)
    w1, b1, w2, b2 = init_params(k2, d_model, d_ff)
    ref = _reference(x, w1, b1, w2, b2)

    prepared_f32 = prepare_ffn_params(w1, b1, w2, b2, compute_dtype=jnp.float32)
    out_f32 = jax.block_until_ready(ffn_apply(x, prepared_f32))
    assert out_f32.shape == (batch, seq, d_model)
    assert jnp.allclose(out_f32, ref, atol=1e-5, rtol=1e-5)

    out_bf16 = jax.block_until_ready(
        position_wise_feed_forward(x, w1, b1, w2, b2))   # bf16 MXU path
    assert jnp.allclose(out_bf16, ref, atol=3e-2, rtol=3e-2)

    # --- test 2: force the streamed-weight path (2 d_ff slabs, f32 acc) ------
    batch2, seq2, d_model2, d_ff2 = 2, 64, 128, 256
    kx, kp = jax.random.split(k3)
    x2 = jax.random.normal(kx, (batch2, seq2, d_model2), jnp.float32)
    params2 = init_params(kp, d_model2, d_ff2)
    ref2 = _reference(x2, *params2)

    prepared2 = prepare_ffn_params(*params2, compute_dtype=jnp.float32)
    out2 = jax.block_until_ready(ffn_apply(x2, prepared2, tff=128))
    assert out2.shape == (batch2, seq2, d_model2)
    assert jnp.allclose(out2, ref2, atol=1e-4, rtol=1e-4)

    print("KERNEL_OK")
</pallas_src>

<mosaic_0001>
module attributes {stable_mosaic.version = 11 : i64} {
  func.func @_ffn_kernel_resident(%arg0: i32, %arg1: memref<16x32xf32, #tpu.memory_space<vmem>>, %arg2: memref<32x128xf32, #tpu.memory_space<vmem>>, %arg3: memref<1x128xf32, #tpu.memory_space<vmem>>, %arg4: memref<128x32xf32, #tpu.memory_space<vmem>>, %arg5: memref<1x32xf32, #tpu.memory_space<vmem>>, %arg6: memref<16x32xf32, #tpu.memory_space<vmem>>) attributes {dimension_semantics = [#tpu.dimension_semantics<parallel>], iteration_bounds = array<i64: 1>, scalar_prefetch = 0 : i64, scratch_operands = 0 : i64, tpu.core_type = #tpu.core_type<tc>, window_params = [{transform_indices = @transform_0, window_bounds = array<i64: 16, 32>}, {pipeline_mode = #tpu.pipeline_mode<synchronous>, transform_indices = @transform_1, window_bounds = array<i64: 32, 128>}, {pipeline_mode = #tpu.pipeline_mode<synchronous>, transform_indices = @transform_2, window_bounds = array<i64: 1, 128>}, {pipeline_mode = #tpu.pipeline_mode<synchronous>, transform_indices = @transform_3, window_bounds = array<i64: 128, 32>}, {pipeline_mode = #tpu.pipeline_mode<synchronous>, transform_indices = @transform_4, window_bounds = array<i64: 1, 32>}, {transform_indices = @transform_5, window_bounds = array<i64: 16, 32>}]} {
    %c0 = arith.constant 0 : index
    %c0_0 = arith.constant 0 : index
    %0 = vector.load %arg1[%c0, %c0_0] : memref<16x32xf32, #tpu.memory_space<vmem>>, vector<16x32xf32>
    %c0_1 = arith.constant 0 : index
    %c0_2 = arith.constant 0 : index
    %1 = vector.load %arg2[%c0_1, %c0_2] : memref<32x128xf32, #tpu.memory_space<vmem>>, vector<32x128xf32>
    %cst = arith.constant dense<0.000000e+00> : vector<16x128xf32>
    %2 = tpu.matmul %0, %1, %cst {dimension_numbers = #tpu.dot_dimension_numbers<[1], [0], [0], [1], [0, 0, 1, 1], [], []>} : vector<16x32xf32>, vector<32x128xf32>, vector<16x128xf32> -> vector<16x128xf32>
    %c0_3 = arith.constant 0 : index
    %c0_4 = arith.constant 0 : index
    %3 = vector.load %arg3[%c0_3, %c0_4] : memref<1x128xf32, #tpu.memory_space<vmem>>, vector<1x128xf32>
    %4 = vector.broadcast %3 : vector<1x128xf32> to vector<16x128xf32>
    %5 = arith.addf %2, %4 : vector<16x128xf32>
    %cst_5 = arith.constant 0.000000e+00 : f32
    %6 = vector.broadcast %cst_5 : f32 to vector<16x128xf32>
    %7 = arith.maximumf %5, %6 : vector<16x128xf32>
    %c0_6 = arith.constant 0 : index
    %c0_7 = arith.constant 0 : index
    %8 = vector.load %arg4[%c0_6, %c0_7] : memref<128x32xf32, #tpu.memory_space<vmem>>, vector<128x32xf32>
    %cst_8 = arith.constant dense<0.000000e+00> : vector<16x32xf32>
    %9 = tpu.matmul %7, %8, %cst_8 {dimension_numbers = #tpu.dot_dimension_numbers<[1], [0], [0], [1], [0, 0, 1, 1], [], []>} : vector<16x128xf32>, vector<128x32xf32>, vector<16x32xf32> -> vector<16x32xf32>
    %c0_9 = arith.constant 0 : index
    %c0_10 = arith.constant 0 : index
    %10 = vector.load %arg5[%c0_9, %c0_10] : memref<1x32xf32, #tpu.memory_space<vmem>>, vector<1x32xf32>
    %11 = vector.broadcast %10 : vector<1x32xf32> to vector<16x32xf32>
    %12 = arith.addf %9, %11 : vector<16x32xf32>
    %c0_11 = arith.constant 0 : index
    %c0_12 = arith.constant 0 : index
    %13 = vector.load %arg6[%c0_11, %c0_12] : memref<16x32xf32, #tpu.memory_space<vmem>>, vector<16x32xf32>
    tpu.vector_store %arg6[%c0_11, %c0_12], %12 {strides = array<i32>} : memref<16x32xf32, #tpu.memory_space<vmem>>, vector<16x32xf32>,
    return
  }
  func.func @transform_0(%arg0: i32) -> (i32, i32) {
    %c0_i32 = arith.constant 0 : i32
    %c0_i32_0 = arith.constant 0 : i32
    return %arg0, %c0_i32 : i32, i32
  }
  func.func @transform_1(%arg0: i32) -> (i32, i32) {
    %c0_i32 = arith.constant 0 : i32
    %c0_i32_0 = arith.constant 0 : i32
    %c0_i32_1 = arith.constant 0 : i32
    return %c0_i32, %c0_i32_0 : i32, i32
  }
  func.func @transform_2(%arg0: i32) -> (i32, i32) {
    %c0_i32 = arith.constant 0 : i32
    %c0_i32_0 = arith.constant 0 : i32
    %c0_i32_1 = arith.constant 0 : i32
    return %c0_i32, %c0_i32_0 : i32, i32
  }
  func.func @transform_3(%arg0: i32) -> (i32, i32) {
    %c0_i32 = arith.constant 0 : i32
    %c0_i32_0 = arith.constant 0 : i32
    %c0_i32_1 = arith.constant 0 : i32
    return %c0_i32, %c0_i32_0 : i32, i32
  }
  func.func @transform_4(%arg0: i32) -> (i32, i32) {
    %c0_i32 = arith.constant 0 : i32
    %c0_i32_0 = arith.constant 0 : i32
    %c0_i32_1 = arith.constant 0 : i32
    return %c0_i32, %c0_i32_0 : i32, i32
  }
  func.func @transform_5(%arg0: i32) -> (i32, i32) {
    %c0_i32 = arith.constant 0 : i32
    %c0_i32_0 = arith.constant 0 : i32
    return %arg0, %c0_i32 : i32, i32
  }
}

</mosaic_0001>

<llo_original>
// kernel: tpu_custom_call.1
$region0: #{tpu_custom_call.1}
  #allocation0 [shape = 'u32[]', space=smem, size = 0x4, offset = 0x4, fixed_abs, tag = 'smem constant byte address 0x4 - core index']
  #allocation1 [shape = 'u32[72,128]{1,0:T(1,128)}', space=vmem, size = 0x9000, scoped, tag = 'internal scratch']
  %s0 = inlined_call_operand.vmem [shape: f32[16,32], index: 0, kind: input, shape index: {}]
  %s1 = inlined_call_operand.vmem [shape: f32[32,128], index: 1, kind: input, shape index: {}]
  %s2 = inlined_call_operand.vmem [shape: f32[1,128], index: 2, kind: input, shape index: {}]
  %s3 = inlined_call_operand.vmem [shape: f32[128,32], index: 3, kind: input, shape index: {}]
  %s4 = inlined_call_operand.vmem [shape: f32[1,32], index: 4, kind: input, shape index: {}]
  %s5 = inlined_call_operand.hbm [shape: f32[16,32], index: 5, kind: output, shape index: {}]
  %s6 = sld [smem:[#allocation0]]
  $region30: #{tpu_custom_call.1} parent=0
    _
  %s8 = ssub.s32 1, %s6
  %s9 = scalar_select 0, %s8, %s6
  $region1: #{tpu_custom_call.1} parent=0
    #allocation2 [shape = 'u8[8192]{0}', space=vmem, size = 0x2000, scoped, tag = 'output window, operand 0, single buffered']
    #allocation3 [shape = 's32[1]{0}', space=sflag, size = 0x4, scoped, tag = 'scoped memory for tpu_custom_call.1']
    %10 = vsyncpa [#allocation3], 0
    // Predicated region
    $region2: #{tpu_custom_call.1} parent=1 // pred_check
      _
    $region3: #{tpu_custom_call.1} parent=1 // pred_check_branch
      %12 = sbr.rel (0) target = $region5
    $region4: #{tpu_custom_call.1} parent=1 // pred_region
      _
    $region5: #{tpu_custom_call.1} parent=1 // pred_fallthru
      _
    // Predicated region
    $region6: #{tpu_custom_call.1} parent=1 // pred_check
      _
    $region7: #{tpu_custom_call.1} parent=1 // pred_check_branch
      %14 = sbr.rel (0) target = $region9
    $region8: #{tpu_custom_call.1} parent=1 // pred_region
      _
    $region9: #{tpu_custom_call.1} parent=1 // pred_fallthru
      _
    // Predicated region
    $region10: #{tpu_custom_call.1} parent=1 // pred_check
      _
    $region11: #{tpu_custom_call.1} parent=1 // pred_check_branch
      %16 = sbr.rel (0) target = $region13
    $region12: #{tpu_custom_call.1} parent=1 // pred_region
      _
    $region13: #{tpu_custom_call.1} parent=1 // pred_fallthru
      _
    // Predicated region
    $region14: #{tpu_custom_call.1} parent=1 // pred_check
      _
    $region15: #{tpu_custom_call.1} parent=1 // pred_check_branch
      %18 = sbr.rel (0) target = $region17
    $region16: #{tpu_custom_call.1} parent=1 // pred_region
      _
    $region17: #{tpu_custom_call.1} parent=1 // pred_fallthru
      _
    // Predicated region
    $region18: #{tpu_custom_call.1} parent=1 // pred_check
      _
    $region19: #{tpu_custom_call.1} parent=1 // pred_check_branch
      %20 = sbr.rel (0) target = $region21
    $region20: #{tpu_custom_call.1} parent=1 // pred_region
      _
    $region21: #{tpu_custom_call.1} parent=1 // pred_fallthru
      _
    %v21 = vld [vmem:[%s0] sm:$0xff]
    %v22 = vld [vmem:[%s0 + $0x8] sm:$0xff]
    %v23 = vld [vmem:[%s1] sm:$0xff]
    %v24 = vld [vmem:[%s1 + $0x8] sm:$0xff]
    %v25 = vld [vmem:[%s1 + $0x10] sm:$0xff]
    %v26 = vld [vmem:[%s1 + $0x18] sm:$0xff]
    %v27 = vld [vmem:[%s2] sm:$0x1]
    %v29 = vperm.slane %v27, 0
    %vm31 = vcmask 261120
    %v33 = vsel %vm31, %v21, 0
    %v36 = vsel %vm31, %v22, 0
    %38 = vmatpush.msra.mxu0 0.0
    %39 = vmatpush.msra.mxu0 0.0
    %40 = vmatpush.msra.mxu0 0.0
    %41 = vmatpush.msra.mxu0 0.0
    %42 = vmatpush.msra.mxu0 0.0
    %43 = vmatpush.msra.mxu0 0.0
    %44 = vmatpush.msra.mxu0 0.0
    %45 = vmatpush.msra.mxu0 0.0
    %46 = vmatpush.msra.mxu0 0.0
    %47 = vmatpush.msra.mxu0 0.0
    %48 = vmatpush.msra.mxu0 0.0
    %49 = vmatpush.msra.mxu0 0.0
    %50 = vmatpush.msra.mxu0 %v26
    %51 = vmatpush.msra.mxu0 %v25
    %52 = vmatpush.msra.mxu0 %v24
    %53 = vmatpush.msra.mxu0 %v23
    %54 = vmatmul.f32.gmra.mxu0 %v33
    %v55 = vpop.f32.mrf.mxu0
    %v56 = vadd.f32 %v29, %v55
    %57 = vmatmul.f32.gmra.mxu0 %v36
    %v58 = vpop.f32.mrf.mxu0
    %v59 = vadd.f32 %v29, %v58
    %60 = vdwg.mxu0
    %v61 = vmax.f32 %v56, 0.0
    %v62 = vmax.f32 %v59, 0.0
    %v63 = vld [vmem:[%s3] sm:$0xff]
    %v64 = vld [vmem:[%s3 + $0x8] sm:$0xff]
    %v65 = vld [vmem:[%s3 + $0x10] sm:$0xff]
    %v66 = vld [vmem:[%s3 + $0x18] sm:$0xff]
    %v67 = vld [vmem:[%s3 + $0x20] sm:$0xff]
    %v68 = vld [vmem:[%s3 + $0x28] sm:$0xff]
    %v69 = vld [vmem:[%s3 + $0x30] sm:$0xff]
    %v70 = vld [vmem:[%s3 + $0x38] sm:$0xff]
    %v71 = vld [vmem:[%s3 + $0x40] sm:$0xff]
    %v72 = vld [vmem:[%s3 + $0x48] sm:$0xff]
    %v73 = vld [vmem:[%s3 + $0x50] sm:$0xff]
    %v74 = vld [vmem:[%s3 + $0x58] sm:$0xff]
    %v75 = vld [vmem:[%s3 + $0x60] sm:$0xff]
    %v76 = vld [vmem:[%s3 + $0x68] sm:$0xff]
    %v77 = vld [vmem:[%s3 + $0x70] sm:$0xff]
    %v78 = vld [vmem:[%s3 + $0x78] sm:$0xff]
    %v79 = vld [vmem:[%s4] sm:$0x1]
    %v81 = vperm.slane %v79, 0
    %83 = vmatpush.msra.mxu0 %v78
    %84 = vmatpush.msra.mxu0 %v77
    %85 = vmatpush.msra.mxu0 %v76
    %86 = vmatpush.msra.mxu0 %v75
    %87 = vmatpush.msra.mxu0 %v74
    %88 = vmatpush.msra.mxu0 %v73
    %89 = vmatpush.msra.mxu0 %v72
    %90 = vmatpush.msra.mxu0 %v71
    %91 = vmatpush.msra.mxu0 %v70
    %92 = vmatpush.msra.mxu0 %v69
    %93 = vmatpush.msra.mxu0 %v68
    %94 = vmatpush.msra.mxu0 %v67
    %95 = vmatpush.msra.mxu0 %v66
    %96 = vmatpush.msra.mxu0 %v65
    %97 = vmatpush.msra.mxu0 %v64
    %98 = vmatpush.msra.mxu0 %v63
    %99 = vmatmul.f32.gmra.mxu0 %v61
    %v100 = vpop.f32.mrf.mxu0
    %v101 = vadd.f32 %v81, %v100
    %102 = vmatmul.f32.gmra.mxu0 %v62
    %v103 = vpop.f32.mrf.mxu0
    %v104 = vadd.f32 %v81, %v103
    %105 = vdwg.mxu0
    %106 = vst.msk [vmem:[#allocation2] sm:$0xff] %vm31, %v101
    %107 = vst.msk [vmem:[#allocation2 + $0x8] sm:$0xff] %vm31, %v104
    // Predicated region
    $region22: #{tpu_custom_call.1} parent=1 // pred_check
      _
    $region23: #{tpu_custom_call.1} parent=1 // pred_check_branch
      %109 = sbr.rel (0) target = $region25
    $region24: #{tpu_custom_call.1} parent=1 // pred_region
      %111 = vsyncadd [#allocation3], 0
      %s112 = sshll.u32 [#allocation2], 4
      %s113 = int_to_ptr.vmem [resolvable:$true] %s112
      %s114 = sshll.u32 %s5, 4
      %s115 = int_to_ptr.hbm [resolvable:$true] %s114
      %120 = dma.vmem_to_hbm [thread:$0]  %s113, 256, %s115, [#allocation3], 128, 128, 8
    $region25: #{tpu_custom_call.1} parent=1 // pred_fallthru
      _
    // Predicated region
    $region26: #{tpu_custom_call.1} parent=1 // pred_check
      _
    $region27: #{tpu_custom_call.1} parent=1 // pred_check_branch
      %122 = sbr.rel (0) target = $region29
    $region28: #{tpu_custom_call.1} parent=1 // pred_region
      %124 = dma.done [#allocation3], 256
    $region29: #{tpu_custom_call.1} parent=1 // pred_fallthru
      _
    %125 = vsyncpa [#allocation3], 1

</llo_original>
